<compile_context>
chip_gen: v7x
topology: tpu7x:2x2x1
jax: 0.10.0
libtpu: 0.0.40
codegen_flags: <defaults>
</compile_context>

<pallas_src>
import functools

import jax
import jax.numpy as jnp
from jax.experimental import pallas as pl
from jax.experimental.pallas import tpu as pltpu

ZDIM = 16
H1, H2, H3, OUT = 120, 200, 120, 71
# Lane/MXU-friendly padded widths (zero padding keeps the real lanes exact).
H1P, H2P, H3P, OUTP = 128, 256, 128, 128


def _round_up(x, m):
    return (x + m - 1) // m * m


def _cdiv(a, b):
    return -(-a // b)


def _pad2(x, rows, cols):
    r, c = x.shape
    return jnp.pad(x, ((0, rows - r), (0, cols - c)))


def decoder_kernel(z_ref, w1_ref, b1_ref, w2_ref, b2_ref,
                   w3_ref, b3_ref, w4_ref, b4_ref, out_ref):
    # z and weights are bf16; biases are f32 (1, width) rows; matmuls
    # accumulate in f32, activations are re-packed to bf16 between layers.
    z = z_ref[...]

    h = jnp.dot(z, w1_ref[...], preferred_element_type=jnp.float32)
    h = jnp.maximum(h + b1_ref[...], 0.0).astype(jnp.bfloat16)

    h = jnp.dot(h, w2_ref[...], preferred_element_type=jnp.float32)
    h = jnp.maximum(h + b2_ref[...], 0.0).astype(jnp.bfloat16)

    h = jnp.dot(h, w3_ref[...], preferred_element_type=jnp.float32)
    h = jnp.maximum(h + b3_ref[...], 0.0).astype(jnp.bfloat16)

    logits = jnp.dot(h, w4_ref[...], preferred_element_type=jnp.float32) + b4_ref[...]
    # Sigmoid in f32 (EUP exp + reciprocal), stored as bf16 to halve writeback.
    out_ref[...] = jax.nn.sigmoid(logits).astype(out_ref.dtype)


@functools.partial(jax.jit, static_argnames=("batch_tile",))
def decoder_forward(z, params, *, batch_tile=2048):
    """z: (B, ZDIM) f32; params: list of (w (in,out), b (1,out)) f32.

    Returns (B, 71) f32, matching the PyTorch forward.
    """
    (w1, b1), (w2, b2), (w3, b3), (w4, b4) = params
    B = z.shape[0]

    # Pad + cast weights (zero padding => real lanes exact; ReLU keeps padded
    # lanes at exactly 0 so downstream real columns are unaffected).
    w1p = _pad2(w1, ZDIM, H1P).astype(jnp.bfloat16)
    w2p = _pad2(w2, H1P, H2P).astype(jnp.bfloat16)
    w3p = _pad2(w3, H2P, H3P).astype(jnp.bfloat16)
    w4p = _pad2(w4, H3P, OUTP).astype(jnp.bfloat16)
    b1p = _pad2(b1, 1, H1P)
    b2p = _pad2(b2, 1, H2P)
    b3p = _pad2(b3, 1, H3P)
    b4p = _pad2(b4, 1, OUTP)

    # Batch tile: multiple of 16 (bf16 sublane packing), capped by the batch,
    # and additionally capped to ~half the batch so the grid stays >= 2 and
    # the "parallel" axis can shard across v7x's two TensorCores.
    B16 = _round_up(B, 16)
    tb = min(_round_up(batch_tile, 16), B16)
    tb = min(tb, _round_up(_cdiv(B16, 2), 16))
    Bp = _round_up(B, tb)
    zp = _pad2(z, Bp, ZDIM).astype(jnp.bfloat16)

    def w_spec(shape):
        return pl.BlockSpec(shape, lambda i: (0,) * len(shape))

    out_padded = pl.pallas_call(
        decoder_kernel,
        out_shape=jax.ShapeDtypeStruct((Bp, OUTP), jnp.bfloat16),
        grid=(Bp // tb,),
        in_specs=[
            pl.BlockSpec((tb, ZDIM), lambda i: (i, 0)),
            w_spec(w1p.shape), w_spec(b1p.shape),
            w_spec(w2p.shape), w_spec(b2p.shape),
            w_spec(w3p.shape), w_spec(b3p.shape),
            w_spec(w4p.shape), w_spec(b4p.shape),
        ],
        out_specs=pl.BlockSpec((tb, OUTP), lambda i: (i, 0)),
        compiler_params=pltpu.CompilerParams(
            dimension_semantics=("parallel",),
            vmem_limit_bytes=32 * 1024 * 1024),
    )(zp, w1p, b1p, w2p, b2p, w3p, b3p, w4p, b4p)

    # Sliced + cast inside the same jit so this fuses rather than re-streaming
    # the padded slab through HBM a second time.
    return out_padded[:B, :OUT].astype(jnp.float32)


def init_params(key):
    """Deterministic init mimicking PyTorch nn.Linear default (uniform +-1/sqrt(fan_in))."""
    dims = [(ZDIM, H1), (H1, H2), (H2, H3), (H3, OUT)]
    params = []
    for (fan_in, fan_out) in dims:
        key, kw, kb = jax.random.split(key, 3)
        bound = 1.0 / jnp.sqrt(fan_in)
        w = jax.random.uniform(kw, (fan_in, fan_out), jnp.float32, -bound, bound)
        b = jax.random.uniform(kb, (1, fan_out), jnp.float32, -bound, bound)
        params.append((w, b))
    return params


def decoder_reference(z, params):
    h = z
    for idx, (w, b) in enumerate(params):
        h = h @ w + b
        if idx < len(params) - 1:
            h = jnp.maximum(h, 0.0)
        else:
            h = jax.nn.sigmoid(h)
    return h


if __name__ == "__main__":
    key = jax.random.PRNGKey(0)
    kp, kz1, kz2 = jax.random.split(key, 3)

    params = init_params(kp)

    # Small batch: exercises the tb == B (single grid step) path.
    B_small = 16
    z_small = jax.random.normal(kz1, (B_small, ZDIM), jnp.float32)
    xhat_small = decoder_forward(z_small, params)
    jax.block_until_ready(xhat_small)
    ref_small = decoder_reference(z_small, params)
    assert xhat_small.shape == (B_small, OUT)
    # bf16 MXU operands + bf16 output vs f32 reference: loosened tolerance.
    assert jnp.allclose(xhat_small, ref_small, atol=3e-2, rtol=3e-2), \
        "small-batch mismatch vs reference"

    # Larger batch: exercises the multi-step (grid >= 2) path with a capped tile.
    B_big = 256
    z_big = jax.random.normal(kz2, (B_big, ZDIM), jnp.float32)
    xhat_big = decoder_forward(z_big, params, batch_tile=128)
    jax.block_until_ready(xhat_big)
    ref_big = decoder_reference(z_big, params)
    assert xhat_big.shape == (B_big, OUT)
    assert jnp.allclose(xhat_big, ref_big, atol=3e-2, rtol=3e-2), \
        "large-batch mismatch vs reference"

    print("KERNEL_OK")
</pallas_src>

<mosaic_0001>
module attributes {stable_mosaic.version = 11 : i64} {
  func.func @decoder_kernel(%arg0: i32, %arg1: memref<16x16xbf16, #tpu.memory_space<vmem>>, %arg2: memref<16x128xbf16, #tpu.memory_space<vmem>>, %arg3: memref<1x128xf32, #tpu.memory_space<vmem>>, %arg4: memref<128x256xbf16, #tpu.memory_space<vmem>>, %arg5: memref<1x256xf32, #tpu.memory_space<vmem>>, %arg6: memref<256x128xbf16, #tpu.memory_space<vmem>>, %arg7: memref<1x128xf32, #tpu.memory_space<vmem>>, %arg8: memref<128x128xbf16, #tpu.memory_space<vmem>>, %arg9: memref<1x128xf32, #tpu.memory_space<vmem>>, %arg10: memref<16x128xbf16, #tpu.memory_space<vmem>>) attributes {dimension_semantics = [#tpu.dimension_semantics<parallel>], iteration_bounds = array<i64: 1>, scalar_prefetch = 0 : i64, scratch_operands = 0 : i64, tpu.core_type = #tpu.core_type<tc>, window_params = [{transform_indices = @transform_0, window_bounds = array<i64: 16, 16>}, {pipeline_mode = #tpu.pipeline_mode<synchronous>, transform_indices = @transform_1, window_bounds = array<i64: 16, 128>}, {pipeline_mode = #tpu.pipeline_mode<synchronous>, transform_indices = @transform_2, window_bounds = array<i64: 1, 128>}, {pipeline_mode = #tpu.pipeline_mode<synchronous>, transform_indices = @transform_3, window_bounds = array<i64: 128, 256>}, {pipeline_mode = #tpu.pipeline_mode<synchronous>, transform_indices = @transform_4, window_bounds = array<i64: 1, 256>}, {pipeline_mode = #tpu.pipeline_mode<synchronous>, transform_indices = @transform_5, window_bounds = array<i64: 256, 128>}, {pipeline_mode = #tpu.pipeline_mode<synchronous>, transform_indices = @transform_6, window_bounds = array<i64: 1, 128>}, {pipeline_mode = #tpu.pipeline_mode<synchronous>, transform_indices = @transform_7, window_bounds = array<i64: 128, 128>}, {pipeline_mode = #tpu.pipeline_mode<synchronous>, transform_indices = @transform_8, window_bounds = array<i64: 1, 128>}, {transform_indices = @transform_9, window_bounds = array<i64: 16, 128>}]} {
    %c0 = arith.constant 0 : index
    %c0_0 = arith.constant 0 : index
    %0 = vector.load %arg1[%c0, %c0_0] : memref<16x16xbf16, #tpu.memory_space<vmem>>, vector<16x16xbf16>
    %c0_1 = arith.constant 0 : index
    %c0_2 = arith.constant 0 : index
    %1 = vector.load %arg2[%c0_1, %c0_2] : memref<16x128xbf16, #tpu.memory_space<vmem>>, vector<16x128xbf16>
    %cst = arith.constant dense<0.000000e+00> : vector<16x128xf32>
    %2 = tpu.matmul %0, %1, %cst {dimension_numbers = #tpu.dot_dimension_numbers<[1], [0], [0], [1], [0, 0, 1, 1], [], []>} : vector<16x16xbf16>, vector<16x128xbf16>, vector<16x128xf32> -> vector<16x128xf32>
    %c0_3 = arith.constant 0 : index
    %c0_4 = arith.constant 0 : index
    %3 = vector.load %arg3[%c0_3, %c0_4] : memref<1x128xf32, #tpu.memory_space<vmem>>, vector<1x128xf32>
    %4 = vector.broadcast %3 : vector<1x128xf32> to vector<16x128xf32>
    %5 = arith.addf %2, %4 : vector<16x128xf32>
    %cst_5 = arith.constant 0.000000e+00 : f32
    %6 = vector.broadcast %cst_5 : f32 to vector<16x128xf32>
    %7 = arith.maximumf %5, %6 : vector<16x128xf32>
    %8 = arith.truncf %7 : vector<16x128xf32> to vector<16x128xbf16>
    %c0_6 = arith.constant 0 : index
    %c0_7 = arith.constant 0 : index
    %9 = vector.load %arg4[%c0_6, %c0_7] : memref<128x256xbf16, #tpu.memory_space<vmem>>, vector<128x256xbf16>
    %cst_8 = arith.constant dense<0.000000e+00> : vector<16x256xf32>
    %10 = tpu.matmul %8, %9, %cst_8 {dimension_numbers = #tpu.dot_dimension_numbers<[1], [0], [0], [1], [0, 0, 1, 1], [], []>} : vector<16x128xbf16>, vector<128x256xbf16>, vector<16x256xf32> -> vector<16x256xf32>
    %c0_9 = arith.constant 0 : index
    %c0_10 = arith.constant 0 : index
    %11 = vector.load %arg5[%c0_9, %c0_10] : memref<1x256xf32, #tpu.memory_space<vmem>>, vector<1x256xf32>
    %12 = vector.broadcast %11 : vector<1x256xf32> to vector<16x256xf32>
    %13 = arith.addf %10, %12 : vector<16x256xf32>
    %cst_11 = arith.constant 0.000000e+00 : f32
    %14 = vector.broadcast %cst_11 : f32 to vector<16x256xf32>
    %15 = arith.maximumf %13, %14 : vector<16x256xf32>
    %16 = arith.truncf %15 : vector<16x256xf32> to vector<16x256xbf16>
    %c0_12 = arith.constant 0 : index
    %c0_13 = arith.constant 0 : index
    %17 = vector.load %arg6[%c0_12, %c0_13] : memref<256x128xbf16, #tpu.memory_space<vmem>>, vector<256x128xbf16>
    %cst_14 = arith.constant dense<0.000000e+00> : vector<16x128xf32>
    %18 = tpu.matmul %16, %17, %cst_14 {dimension_numbers = #tpu.dot_dimension_numbers<[1], [0], [0], [1], [0, 0, 1, 1], [], []>} : vector<16x256xbf16>, vector<256x128xbf16>, vector<16x128xf32> -> vector<16x128xf32>
    %c0_15 = arith.constant 0 : index
    %c0_16 = arith.constant 0 : index
    %19 = vector.load %arg7[%c0_15, %c0_16] : memref<1x128xf32, #tpu.memory_space<vmem>>, vector<1x128xf32>
    %20 = vector.broadcast %19 : vector<1x128xf32> to vector<16x128xf32>
    %21 = arith.addf %18, %20 : vector<16x128xf32>
    %cst_17 = arith.constant 0.000000e+00 : f32
    %22 = vector.broadcast %cst_17 : f32 to vector<16x128xf32>
    %23 = arith.maximumf %21, %22 : vector<16x128xf32>
    %24 = arith.truncf %23 : vector<16x128xf32> to vector<16x128xbf16>
    %c0_18 = arith.constant 0 : index
    %c0_19 = arith.constant 0 : index
    %25 = vector.load %arg8[%c0_18, %c0_19] : memref<128x128xbf16, #tpu.memory_space<vmem>>, vector<128x128xbf16>
    %cst_20 = arith.constant dense<0.000000e+00> : vector<16x128xf32>
    %26 = tpu.matmul %24, %25, %cst_20 {dimension_numbers = #tpu.dot_dimension_numbers<[1], [0], [0], [1], [0, 0, 1, 1], [], []>} : vector<16x128xbf16>, vector<128x128xbf16>, vector<16x128xf32> -> vector<16x128xf32>
    %c0_21 = arith.constant 0 : index
    %c0_22 = arith.constant 0 : index
    %27 = vector.load %arg9[%c0_21, %c0_22] : memref<1x128xf32, #tpu.memory_space<vmem>>, vector<1x128xf32>
    %28 = vector.broadcast %27 : vector<1x128xf32> to vector<16x128xf32>
    %29 = arith.addf %26, %28 : vector<16x128xf32>
    %30 = arith.negf %29 : vector<16x128xf32>
    %31 = math.exp %30 : vector<16x128xf32>
    %cst_23 = arith.constant 1.000000e+00 : f32
    %32 = vector.broadcast %cst_23 : f32 to vector<16x128xf32>
    %33 = arith.addf %32, %31 : vector<16x128xf32>
    %34 = arith.divf %32, %33 : vector<16x128xf32>
    %35 = arith.truncf %34 : vector<16x128xf32> to vector<16x128xbf16>
    %c0_24 = arith.constant 0 : index
    %c0_25 = arith.constant 0 : index
    %36 = vector.load %arg10[%c0_24, %c0_25] : memref<16x128xbf16, #tpu.memory_space<vmem>>, vector<16x128xbf16>
    tpu.vector_store %arg10[%c0_24, %c0_25], %35 {strides = array<i32>} : memref<16x128xbf16, #tpu.memory_space<vmem>>, vector<16x128xbf16>,
    return
  }
  func.func @transform_0(%arg0: i32) -> (i32, i32) {
    %c0_i32 = arith.constant 0 : i32
    %c0_i32_0 = arith.constant 0 : i32
    return %arg0, %c0_i32 : i32, i32
  }
  func.func @transform_1(%arg0: i32) -> (i32, i32) {
    %c0_i32 = arith.constant 0 : i32
    %c0_i32_0 = arith.constant 0 : i32
    %c0_i32_1 = arith.constant 0 : i32
    return %c0_i32, %c0_i32_0 : i32, i32
  }
  func.func @transform_2(%arg0: i32) -> (i32, i32) {
    %c0_i32 = arith.constant 0 : i32
    %c0_i32_0 = arith.constant 0 : i32
    %c0_i32_1 = arith.constant 0 : i32
    return %c0_i32, %c0_i32_0 : i32, i32
  }
  func.func @transform_3(%arg0: i32) -> (i32, i32) {
    %c0_i32 = arith.constant 0 : i32
    %c0_i32_0 = arith.constant 0 : i32
    %c0_i32_1 = arith.constant 0 : i32
    return %c0_i32, %c0_i32_0 : i32, i32
  }
  func.func @transform_4(%arg0: i32) -> (i32, i32) {
    %c0_i32 = arith.constant 0 : i32
    %c0_i32_0 = arith.constant 0 : i32
    %c0_i32_1 = arith.constant 0 : i32
    return %c0_i32, %c0_i32_0 : i32, i32
  }
  func.func @transform_5(%arg0: i32) -> (i32, i32) {
    %c0_i32 = arith.constant 0 : i32
    %c0_i32_0 = arith.constant 0 : i32
    %c0_i32_1 = arith.constant 0 : i32
    return %c0_i32, %c0_i32_0 : i32, i32
  }
  func.func @transform_6(%arg0: i32) -> (i32, i32) {
    %c0_i32 = arith.constant 0 : i32
    %c0_i32_0 = arith.constant 0 : i32
    %c0_i32_1 = arith.constant 0 : i32
    return %c0_i32, %c0_i32_0 : i32, i32
  }
  func.func @transform_7(%arg0: i32) -> (i32, i32) {
    %c0_i32 = arith.constant 0 : i32
    %c0_i32_0 = arith.constant 0 : i32
    %c0_i32_1 = arith.constant 0 : i32
    return %c0_i32, %c0_i32_0 : i32, i32
  }
  func.func @transform_8(%arg0: i32) -> (i32, i32) {
    %c0_i32 = arith.constant 0 : i32
    %c0_i32_0 = arith.constant 0 : i32
    %c0_i32_1 = arith.constant 0 : i32
    return %c0_i32, %c0_i32_0 : i32, i32
  }
  func.func @transform_9(%arg0: i32) -> (i32, i32) {
    %c0_i32 = arith.constant 0 : i32
    %c0_i32_0 = arith.constant 0 : i32
    return %arg0, %c0_i32 : i32, i32
  }
}

</mosaic_0001>

<llo_original>
// kernel: decoder_forward.1
$region0: #{decoder_forward.1}
  #allocation0 [shape = 'u32[]', space=smem, size = 0x4, offset = 0x4, fixed_abs, tag = 'smem constant byte address 0x4 - core index']
  #allocation1 [shape = 'u32[144,128]{1,0:T(1,128)}', space=vmem, size = 0x12000, scoped, tag = 'internal scratch']
  %s0 = inlined_call_operand.vmem [shape: bf16[16,16], index: 0, kind: input, shape index: {}]
  %s1 = inlined_call_operand.vmem [shape: bf16[16,128], index: 1, kind: input, shape index: {}]
  %s2 = inlined_call_operand.vmem [shape: f32[1,128], index: 2, kind: input, shape index: {}]
  %s3 = inlined_call_operand.vmem [shape: bf16[128,256], index: 3, kind: input, shape index: {}]
  %s4 = inlined_call_operand.vmem [shape: f32[1,256], index: 4, kind: input, shape index: {}]
  %s5 = inlined_call_operand.vmem [shape: bf16[256,128], index: 5, kind: input, shape index: {}]
  %s6 = inlined_call_operand.vmem [shape: f32[1,128], index: 6, kind: input, shape index: {}]
  %s7 = inlined_call_operand.vmem [shape: bf16[128,128], index: 7, kind: input, shape index: {}]
  %s8 = inlined_call_operand.vmem [shape: f32[1,128], index: 8, kind: input, shape index: {}]
  %s9 = inlined_call_operand.vmem [shape: bf16[16,128], index: 9, kind: output, shape index: {}]
  %s10 = sld [smem:[#allocation0]]
  $region46: #{decoder_forward.1} parent=0
    _
  %s12 = ssub.s32 1, %s10
  %s13 = scalar_select 0, %s12, %s10
  // Predicated region
  $region2: #{decoder_forward.1} parent=0 // pred_check
    _
  $region3: #{decoder_forward.1} parent=0 // pred_check_branch
    %15 = sbr.rel (0) target = $region5
  $region4: #{decoder_forward.1} parent=0 // pred_region
    _
  $region5: #{decoder_forward.1} parent=0 // pred_fallthru
    _
  // Predicated region
  $region6: #{decoder_forward.1} parent=0 // pred_check
    _
  $region7: #{decoder_forward.1} parent=0 // pred_check_branch
    %17 = sbr.rel (0) target = $region9
  $region8: #{decoder_forward.1} parent=0 // pred_region
    _
  $region9: #{decoder_forward.1} parent=0 // pred_fallthru
    _
  // Predicated region
  $region10: #{decoder_forward.1} parent=0 // pred_check
    _
  $region11: #{decoder_forward.1} parent=0 // pred_check_branch
    %19 = sbr.rel (0) target = $region13
  $region12: #{decoder_forward.1} parent=0 // pred_region
    _
  $region13: #{decoder_forward.1} parent=0 // pred_fallthru
    _
  // Predicated region
  $region14: #{decoder_forward.1} parent=0 // pred_check
    _
  $region15: #{decoder_forward.1} parent=0 // pred_check_branch
    %21 = sbr.rel (0) target = $region17
  $region16: #{decoder_forward.1} parent=0 // pred_region
    _
  $region17: #{decoder_forward.1} parent=0 // pred_fallthru
    _
  // Predicated region
  $region18: #{decoder_forward.1} parent=0 // pred_check
    _
  $region19: #{decoder_forward.1} parent=0 // pred_check_branch
    %23 = sbr.rel (0) target = $region21
  $region20: #{decoder_forward.1} parent=0 // pred_region
    _
  $region21: #{decoder_forward.1} parent=0 // pred_fallthru
    _
  // Predicated region
  $region22: #{decoder_forward.1} parent=0 // pred_check
    _
  $region23: #{decoder_forward.1} parent=0 // pred_check_branch
    %25 = sbr.rel (0) target = $region25
  $region24: #{decoder_forward.1} parent=0 // pred_region
    _
  $region25: #{decoder_forward.1} parent=0 // pred_fallthru
    _
  // Predicated region
  $region26: #{decoder_forward.1} parent=0 // pred_check
    _
  $region27: #{decoder_forward.1} parent=0 // pred_check_branch
    %27 = sbr.rel (0) target = $region29
  $region28: #{decoder_forward.1} parent=0 // pred_region
    _
  $region29: #{decoder_forward.1} parent=0 // pred_fallthru
    _
  // Predicated region
  $region30: #{decoder_forward.1} parent=0 // pred_check
    _
  $region31: #{decoder_forward.1} parent=0 // pred_check_branch
    %29 = sbr.rel (0) target = $region33
  $region32: #{decoder_forward.1} parent=0 // pred_region
    _
  $region33: #{decoder_forward.1} parent=0 // pred_fallthru
    _
  // Predicated region
  $region34: #{decoder_forward.1} parent=0 // pred_check
    _
  $region35: #{decoder_forward.1} parent=0 // pred_check_branch
    %31 = sbr.rel (0) target = $region37
  $region36: #{decoder_forward.1} parent=0 // pred_region
    _
  $region37: #{decoder_forward.1} parent=0 // pred_fallthru
    _
  %v33 = vld [vmem:[%s0] sm:$0xf]
  %v34 = vld [vmem:[%s0 + $0x4] sm:$0xf]
  %v35 = vld [vmem:[%s1] sm:$0xf]
  %v36 = vld [vmem:[%s1 + $0x4] sm:$0xf]
  %v37 = vld [vmem:[%s2] sm:$0x1]
  %v39 = vlaneseq
  %v40 = vshrl.u32 %v39, 7
  %v41 = vsub.s32 0, %v40
  %v42 = vrot.slane %v37, %v41
  %v46 = vunpack.c.l.b16 %v33
  %v47 = vunpack.c.l.b16 %v34
  %v48 = vpack.c.b16 %v47, %v46
  %v51 = vunpack.c.l.b16 %v35
  %v52 = vunpack.c.l.b16 %v36
  %v53 = vpack.c.b16 %v52, %v51
  %vm55 = vcmask 130048
  %v57 = vsel %vm55, %v48, 0
  %59 = vmatprep.subr.bf16.mxu0 0
  %60 = vmatpush1.bf16.msra.mxu0 %v53
  %61 = vmatprep.subr.bf16.mxu0 0
  %62 = vmatpush1.bf16.msra.mxu0 0
  %63 = vmatprep.subr.bf16.mxu0 0
  %64 = vmatpush1.bf16.msra.mxu0 0
  %65 = vmatprep.subr.bf16.mxu0 0
  %66 = vmatpush1.bf16.msra.mxu0 0
  %67 = vmatprep.subr.bf16.mxu0 0
  %68 = vmatpush1.bf16.msra.mxu0 0
  %69 = vmatprep.subr.bf16.mxu0 0
  %70 = vmatpush1.bf16.msra.mxu0 0
  %71 = vmatprep.subr.bf16.mxu0 0
  %72 = vmatpush1.bf16.msra.mxu0 0
  %73 = vmatprep.subr.bf16.mxu0 0
  %74 = vmatpush1.bf16.msra.mxu0 0
  %75 = vmatprep.subr.bf16.mxu0 0
  %76 = vmatpush1.bf16.msra.mxu0 0
  %77 = vmatprep.subr.bf16.mxu0 0
  %78 = vmatpush1.bf16.msra.mxu0 0
  %79 = vmatprep.subr.bf16.mxu0 0
  %80 = vmatpush1.bf16.msra.mxu0 0
  %81 = vmatprep.subr.bf16.mxu0 0
  %82 = vmatpush1.bf16.msra.mxu0 0
  %83 = vmatprep.subr.bf16.mxu0 0
  %84 = vmatpush1.bf16.msra.mxu0 0
  %85 = vmatprep.subr.bf16.mxu0 0
  %86 = vmatpush1.bf16.msra.mxu0 0
  %87 = vmatprep.subr.bf16.mxu0 0
  %88 = vmatpush1.bf16.msra.mxu0 0
  %89 = vmatprep.subr.bf16.mxu0 0
  %90 = vmatpush1.bf16.msra.mxu0 0
  %91 = vmatprep.mubr.bf16.mxu0 0
  %92 = vmatmul.mubr.bf16.gmra.mrb[0].mxu0 %v57
  %v93 = vpop.f32.mrb[0].mxu0
  %v94 = vadd.f32 %v42, %v93
  %v95 = vpop.f32.mrb[0].mxu0
  %v96 = vpop.f32.mrb[0].mxu0
  %v97 = vadd.f32 %v42, %v96
  %v98 = vpop.f32.mrb[0].mxu0
  %99 = vdwg.mxu0
  %v100 = vmax.f32 %v94, 0.0
  %v101 = vmax.f32 %v97, 0.0
  %v102 = vpack.c.bf16 %v101, %v100
  %v103 = vld [vmem:[%s3] sm:$0xff]
  %v104 = vld [vmem:[%s3 + $0x8] sm:$0xff]
  %v105 = vld [vmem:[%s3 + $0x10] sm:$0xff]
  %v106 = vld [vmem:[%s3 + $0x18] sm:$0xff]
  %v107 = vld [vmem:[%s3 + $0x20] sm:$0xff]
  %v108 = vld [vmem:[%s3 + $0x28] sm:$0xff]
  %v109 = vld [vmem:[%s3 + $0x30] sm:$0xff]
  %v110 = vld [vmem:[%s3 + $0x38] sm:$0xff]
  %v111 = vld [vmem:[%s3 + $0x40] sm:$0xff]
  %v112 = vld [vmem:[%s3 + $0x48] sm:$0xff]
  %v113 = vld [vmem:[%s3 + $0x50] sm:$0xff]
  %v114 = vld [vmem:[%s3 + $0x58] sm:$0xff]
  %v115 = vld [vmem:[%s3 + $0x60] sm:$0xff]
  %v116 = vld [vmem:[%s3 + $0x68] sm:$0xff]
  %v117 = vld [vmem:[%s3 + $0x70] sm:$0xff]
  %v118 = vld [vmem:[%s3 + $0x78] sm:$0xff]
  %v119 = vld [vmem:[%s4] sm:$0x3]
  %v121 = vlaneseq
  %v122 = vshrl.u32 %v121, 7
  %v123 = vsub.s32 0, %v122
  %v124 = vrot.slane %v119, %v123
  %v125 = vlaneseq
  %v126 = vshrl.u32 %v125, 7
  %v127 = vsub.s32 1, %v126
  %v128 = vrot.slane %v119, %v127
  %v147 = vunpack.c.l.b16 %v103
  %v148 = vunpack.c.h.b16 %v103
  %v149 = vunpack.c.l.b16 %v104
  %v150 = vunpack.c.h.b16 %v104
  %v151 = vunpack.c.l.b16 %v105
  %v152 = vunpack.c.h.b16 %v105
  %v153 = vunpack.c.l.b16 %v106
  %v154 = vunpack.c.h.b16 %v106
  %v155 = vunpack.c.l.b16 %v107
  %v156 = vunpack.c.h.b16 %v107
  %v157 = vunpack.c.l.b16 %v108
  %v158 = vunpack.c.h.b16 %v108
  %v159 = vunpack.c.l.b16 %v109
  %v160 = vunpack.c.h.b16 %v109
  %v161 = vunpack.c.l.b16 %v110
  %v162 = vunpack.c.h.b16 %v110
  %v163 = vunpack.c.l.b16 %v111
  %v164 = vunpack.c.h.b16 %v111
  %v165 = vunpack.c.l.b16 %v112
  %v166 = vunpack.c.h.b16 %v112
  %v167 = vunpack.c.l.b16 %v113
  %v168 = vunpack.c.h.b16 %v113
  %v169 = vunpack.c.l.b16 %v114
  %v170 = vunpack.c.h.b16 %v114
  %v171 = vunpack.c.l.b16 %v115
  %v172 = vunpack.c.h.b16 %v115
  %v173 = vunpack.c.l.b16 %v116
  %v174 = vunpack.c.h.b16 %v116
  %v175 = vunpack.c.l.b16 %v117
  %v176 = vunpack.c.h.b16 %v117
  %v177 = vunpack.c.l.b16 %v118
  %v178 = vunpack.c.h.b16 %v118
  %v179 = vpack.c.b16 %v149, %v147
  %v180 = vpack.c.b16 %v150, %v148
  %v181 = vpack.c.b16 %v153, %v151
  %v182 = vpack.c.b16 %v154, %v152
  %v183 = vpack.c.b16 %v157, %v155
  %v184 = vpack.c.b16 %v158, %v156
  %v185 = vpack.c.b16 %v161, %v159
  %v186 = vpack.c.b16 %v162, %v160
  %v187 = vpack.c.b16 %v165, %v163
  %v188 = vpack.c.b16 %v166, %v164
  %v189 = vpack.c.b16 %v169, %v167
  %v190 = vpack.c.b16 %v170, %v168
  %v191 = vpack.c.b16 %v173, %v171
  %v192 = vpack.c.b16 %v174, %v172
  %v193 = vpack.c.b16 %v177, %v175
  %v194 = vpack.c.b16 %v178, %v176
  %211 = vmatprep.subr.bf16.mxu0 %v180
  %212 = vmatpush1.bf16.msra.mxu0 %v179
  %213 = vmatprep.subr.bf16.mxu0 %v182
  %214 = vmatpush1.bf16.msra.mxu0 %v181
  %215 = vmatprep.subr.bf16.mxu0 %v184
  %216 = vmatpush1.bf16.msra.mxu0 %v183
  %217 = vmatprep.subr.bf16.mxu0 %v186
  %218 = vmatpush1.bf16.msra.mxu0 %v185
  %219 = vmatprep.subr.bf16.mxu0 %v188
  %220 = vmatpush1.bf16.msra.mxu0 %v187
  %221 = vmatprep.subr.bf16.mxu0 %v190
  %222 = vmatpush1.bf16.msra.mxu0 %v189
  %223 = vmatprep.subr.bf16.mxu0 %v192
  %224 = vmatpush1.bf16.msra.mxu0 %v191
  %225 = vmatprep.subr.bf16.mxu0 %v194
  %226 = vmatpush1.bf16.msra.mxu0 %v193
  %227 = vmatprep.subr.bf16.mxu0 0
  %228 = vmatpush1.bf16.msra.mxu0 0
  %229 = vmatprep.subr.bf16.mxu0 0
  %230 = vmatpush1.bf16.msra.mxu0 0
  %231 = vmatprep.subr.bf16.mxu0 0
  %232 = vmatpush1.bf16.msra.mxu0 0
  %233 = vmatprep.subr.bf16.mxu0 0
  %234 = vmatpush1.bf16.msra.mxu0 0
  %235 = vmatprep.subr.bf16.mxu0 0
  %236 = vmatpush1.bf16.msra.mxu0 0
  %237 = vmatprep.subr.bf16.mxu0 0
  %238 = vmatpush1.bf16.msra.mxu0 0
  %239 = vmatprep.subr.bf16.mxu0 0
  %240 = vmatpush1.bf16.msra.mxu0 0
  %241 = vmatprep.subr.bf16.mxu0 0
  %242 = vmatpush1.bf16.msra.mxu0 0
  %243 = vmatprep.mubr.bf16.mxu0 0
  %244 = vmatmul.mubr.bf16.gmra.mrb[0].mxu0 %v102
  %v245 = vpop.f32.mrb[0].mxu0
  %v246 = vadd.f32 %v124, %v245
  %v247 = vpop.f32.mrb[0].mxu0
  %v248 = vadd.f32 %v128, %v247
  %v249 = vpop.f32.mrb[0].mxu0
  %v250 = vadd.f32 %v124, %v249
  %v251 = vpop.f32.mrb[0].mxu0
  %v252 = vadd.f32 %v128, %v251
  %253 = vdwg.mxu0
  %v254 = vmax.f32 %v246, 0.0
  %v255 = vmax.f32 %v248, 0.0
  %v256 = vmax.f32 %v250, 0.0
  %v257 = vmax.f32 %v252, 0.0
  %v258 = vpack.c.bf16 %v256, %v254
  %v259 = vpack.c.bf16 %v257, %v255
  %v260 = vld [vmem:[%s5] sm:$0xf]
  %v261 = vld [vmem:[%s5 + $0x4] sm:$0xf]
  %v262 = vld [vmem:[%s5 + $0x8] sm:$0xf]
  %v263 = vld [vmem:[%s5 + $0xc] sm:$0xf]
  %v264 = vld [vmem:[%s5 + $0x10] sm:$0xf]
  %v265 = vld [vmem:[%s5 + $0x14] sm:$0xf]
  %v266 = vld [vmem:[%s5 + $0x18] sm:$0xf]
  %v267 = vld [vmem:[%s5 + $0x1c] sm:$0xf]
  %v268 = vld [vmem:[%s5 + $0x20] sm:$0xf]
  %v269 = vld [vmem:[%s5 + $0x24] sm:$0xf]
  %v270 = vld [vmem:[%s5 + $0x28] sm:$0xf]
  %v271 = vld [vmem:[%s5 + $0x2c] sm:$0xf]
  %v272 = vld [vmem:[%s5 + $0x30] sm:$0xf]
  %v273 = vld [vmem:[%s5 + $0x34] sm:$0xf]
  %v274 = vld [vmem:[%s5 + $0x38] sm:$0xf]
  %v275 = vld [vmem:[%s5 + $0x3c] sm:$0xf]
  %v276 = vld [vmem:[%s5 + $0x40] sm:$0xf]
  %v277 = vld [vmem:[%s5 + $0x44] sm:$0xf]
  %v278 = vld [vmem:[%s5 + $0x48] sm:$0xf]
  %v279 = vld [vmem:[%s5 + $0x4c] sm:$0xf]
  %v280 = vld [vmem:[%s5 + $0x50] sm:$0xf]
  %v281 = vld [vmem:[%s5 + $0x54] sm:$0xf]
  %v282 = vld [vmem:[%s5 + $0x58] sm:$0xf]
  %v283 = vld [vmem:[%s5 + $0x5c] sm:$0xf]
  %v284 = vld [vmem:[%s5 + $0x60] sm:$0xf]
  %v285 = vld [vmem:[%s5 + $0x64] sm:$0xf]
  %v286 = vld [vmem:[%s5 + $0x68] sm:$0xf]
  %v287 = vld [vmem:[%s5 + $0x6c] sm:$0xf]
  %v288 = vld [vmem:[%s5 + $0x70] sm:$0xf]
  %v289 = vld [vmem:[%s5 + $0x74] sm:$0xf]
  %v290 = vld [vmem:[%s5 + $0x78] sm:$0xf]
  %v291 = vld [vmem:[%s5 + $0x7c] sm:$0xf]
  %v292 = vld [vmem:[%s6] sm:$0x1]
  %v294 = vlaneseq
  %v295 = vshrl.u32 %v294, 7
  %v296 = vsub.s32 0, %v295
  %v297 = vrot.slane %v292, %v296
  %v331 = vunpack.c.l.b16 %v260
  %v332 = vunpack.c.l.b16 %v261
  %v333 = vunpack.c.l.b16 %v262
  %v334 = vunpack.c.l.b16 %v263
  %v335 = vunpack.c.l.b16 %v264
  %v336 = vunpack.c.l.b16 %v265
  %v337 = vunpack.c.l.b16 %v266
  %v338 = vunpack.c.l.b16 %v267
  %v339 = vunpack.c.l.b16 %v268
  %v340 = vunpack.c.l.b16 %v269
  %v341 = vunpack.c.l.b16 %v270
  %v342 = vunpack.c.l.b16 %v271
  %v343 = vunpack.c.l.b16 %v272
  %v344 = vunpack.c.l.b16 %v273
  %v345 = vunpack.c.l.b16 %v274
  %v346 = vunpack.c.l.b16 %v275
  %v347 = vunpack.c.l.b16 %v276
  %v348 = vunpack.c.l.b16 %v277
  %v349 = vunpack.c.l.b16 %v278
  %v350 = vunpack.c.l.b16 %v279
  %v351 = vunpack.c.l.b16 %v280
  %v352 = vunpack.c.l.b16 %v281
  %v353 = vunpack.c.l.b16 %v282
  %v354 = vunpack.c.l.b16 %v283
  %v355 = vunpack.c.l.b16 %v284
  %v356 = vunpack.c.l.b16 %v285
  %v357 = vunpack.c.l.b16 %v286
  %v358 = vunpack.c.l.b16 %v287
  %v359 = vunpack.c.l.b16 %v288
  %v360 = vunpack.c.l.b16 %v289
  %v361 = vunpack.c.l.b16 %v290
  %v362 = vunpack.c.l.b16 %v291
  %v363 = vpack.c.b16 %v332, %v331
  %v364 = vpack.c.b16 %v334, %v333
  %v365 = vpack.c.b16 %v336, %v335
  %v366 = vpack.c.b16 %v338, %v337
  %v367 = vpack.c.b16 %v340, %v339
  %v368 = vpack.c.b16 %v342, %v341
  %v369 = vpack.c.b16 %v344, %v343
  %v370 = vpack.c.b16 %v346, %v345
  %v371 = vpack.c.b16 %v348, %v347
  %v372 = vpack.c.b16 %v350, %v349
  %v373 = vpack.c.b16 %v352, %v351
  %v374 = vpack.c.b16 %v354, %v353
  %v375 = vpack.c.b16 %v356, %v355
  %v376 = vpack.c.b16 %v358, %v357
  %v377 = vpack.c.b16 %v360, %v359
  %v378 = vpack.c.b16 %v362, %v361
  %395 = vmatprep.subr.bf16.mxu0 0
  %396 = vmatpush1.bf16.msra.mxu0 %v363
  %397 = vmatprep.subr.bf16.mxu0 0
  %398 = vmatpush1.bf16.msra.mxu0 %v364
  %399 = vmatprep.subr.bf16.mxu0 0
  %400 = vmatpush1.bf16.msra.mxu0 %v365
  %401 = vmatprep.subr.bf16.mxu0 0
  %402 = vmatpush1.bf16.msra.mxu0 %v366
  %403 = vmatprep.subr.bf16.mxu0 0
  %404 = vmatpush1.bf16.msra.mxu0 %v367
  %405 = vmatprep.subr.bf16.mxu0 0
  %406 = vmatpush1.bf16.msra.mxu0 %v368
  %407 = vmatprep.subr.bf16.mxu0 0
  %408 = vmatpush1.bf16.msra.mxu0 %v369
  %409 = vmatprep.subr.bf16.mxu0 0
  %410 = vmatpush1.bf16.msra.mxu0 %v370
  %411 = vmatprep.subr.bf16.mxu0 0
  %412 = vmatpush1.bf16.msra.mxu0 %v371
  %413 = vmatprep.subr.bf16.mxu0 0
  %414 = vmatpush1.bf16.msra.mxu0 %v372
  %415 = vmatprep.subr.bf16.mxu0 0
  %416 = vmatpush1.bf16.msra.mxu0 %v373
  %417 = vmatprep.subr.bf16.mxu0 0
  %418 = vmatpush1.bf16.msra.mxu0 %v374
  %419 = vmatprep.subr.bf16.mxu0 0
  %420 = vmatpush1.bf16.msra.mxu0 %v375
  %421 = vmatprep.subr.bf16.mxu0 0
  %422 = vmatpush1.bf16.msra.mxu0 %v376
  %423 = vmatprep.subr.bf16.mxu0 0
  %424 = vmatpush1.bf16.msra.mxu0 %v377
  %425 = vmatprep.subr.bf16.mxu0 0
  %426 = vmatpush1.bf16.msra.mxu0 %v378
  %427 = vmatprep.mubr.bf16.mxu0 %v259
  %428 = vmatmul.mubr.bf16.gmra.mrb[0].mxu0 %v258
  %v429 = vpop.f32.mrb[0].mxu0
  %v430 = vadd.f32 %v297, %v429
  %v431 = vpop.f32.mrb[0].mxu0
  %v432 = vpop.f32.mrb[0].mxu0
  %v433 = vadd.f32 %v297, %v432
  %v434 = vpop.f32.mrb[0].mxu0
  %435 = vdwg.mxu0
  %v436 = vmax.f32 %v430, 0.0
  %v437 = vmax.f32 %v433, 0.0
  %v438 = vpack.c.bf16 %v437, %v436
  %v439 = vld [vmem:[%s7] sm:$0xf]
  %v440 = vld [vmem:[%s7 + $0x4] sm:$0xf]
  %v441 = vld [vmem:[%s7 + $0x8] sm:$0xf]
  %v442 = vld [vmem:[%s7 + $0xc] sm:$0xf]
  %v443 = vld [vmem:[%s7 + $0x10] sm:$0xf]
  %v444 = vld [vmem:[%s7 + $0x14] sm:$0xf]
  %v445 = vld [vmem:[%s7 + $0x18] sm:$0xf]
  %v446 = vld [vmem:[%s7 + $0x1c] sm:$0xf]
  %v447 = vld [vmem:[%s7 + $0x20] sm:$0xf]
  %v448 = vld [vmem:[%s7 + $0x24] sm:$0xf]
  %v449 = vld [vmem:[%s7 + $0x28] sm:$0xf]
  %v450 = vld [vmem:[%s7 + $0x2c] sm:$0xf]
  %v451 = vld [vmem:[%s7 + $0x30] sm:$0xf]
  %v452 = vld [vmem:[%s7 + $0x34] sm:$0xf]
  %v453 = vld [vmem:[%s7 + $0x38] sm:$0xf]
  %v454 = vld [vmem:[%s7 + $0x3c] sm:$0xf]
  %v455 = vld [vmem:[%s8] sm:$0x1]
  %v457 = vlaneseq
  %v458 = vshrl.u32 %v457, 7
  %v459 = vsub.s32 0, %v458
  %v460 = vrot.slane %v455, %v459
  %v478 = vunpack.c.l.b16 %v439
  %v479 = vunpack.c.l.b16 %v440
  %v480 = vunpack.c.l.b16 %v441
  %v481 = vunpack.c.l.b16 %v442
  %v482 = vunpack.c.l.b16 %v443
  %v483 = vunpack.c.l.b16 %v444
  %v484 = vunpack.c.l.b16 %v445
  %v485 = vunpack.c.l.b16 %v446
  %v486 = vunpack.c.l.b16 %v447
  %v487 = vunpack.c.l.b16 %v448
  %v488 = vunpack.c.l.b16 %v449
  %v489 = vunpack.c.l.b16 %v450
  %v490 = vunpack.c.l.b16 %v451
  %v491 = vunpack.c.l.b16 %v452
  %v492 = vunpack.c.l.b16 %v453
  %v493 = vunpack.c.l.b16 %v454
  %v494 = vpack.c.b16 %v479, %v478
  %v495 = vpack.c.b16 %v481, %v480
  %v496 = vpack.c.b16 %v483, %v482
  %v497 = vpack.c.b16 %v485, %v484
  %v498 = vpack.c.b16 %v487, %v486
  %v499 = vpack.c.b16 %v489, %v488
  %v500 = vpack.c.b16 %v491, %v490
  %v501 = vpack.c.b16 %v493, %v492
  %510 = vmatprep.subr.bf16.mxu0 0
  %511 = vmatpush1.bf16.msra.mxu0 %v494
  %512 = vmatprep.subr.bf16.mxu0 0
  %513 = vmatpush1.bf16.msra.mxu0 %v495
  %514 = vmatprep.subr.bf16.mxu0 0
  %515 = vmatpush1.bf16.msra.mxu0 %v496
  %516 = vmatprep.subr.bf16.mxu0 0
  %517 = vmatpush1.bf16.msra.mxu0 %v497
  %518 = vmatprep.subr.bf16.mxu0 0
  %519 = vmatpush1.bf16.msra.mxu0 %v498
  %520 = vmatprep.subr.bf16.mxu0 0
  %521 = vmatpush1.bf16.msra.mxu0 %v499
  %522 = vmatprep.subr.bf16.mxu0 0
  %523 = vmatpush1.bf16.msra.mxu0 %v500
  %524 = vmatprep.subr.bf16.mxu0 0
  %525 = vmatpush1.bf16.msra.mxu0 %v501
  %526 = vmatprep.subr.bf16.mxu0 0
  %527 = vmatpush1.bf16.msra.mxu0 0
  %528 = vmatprep.subr.bf16.mxu0 0
  %529 = vmatpush1.bf16.msra.mxu0 0
  %530 = vmatprep.subr.bf16.mxu0 0
  %531 = vmatpush1.bf16.msra.mxu0 0
  %532 = vmatprep.subr.bf16.mxu0 0
  %533 = vmatpush1.bf16.msra.mxu0 0
  %534 = vmatprep.subr.bf16.mxu0 0
  %535 = vmatpush1.bf16.msra.mxu0 0
  %536 = vmatprep.subr.bf16.mxu0 0
  %537 = vmatpush1.bf16.msra.mxu0 0
  %538 = vmatprep.subr.bf16.mxu0 0
  %539 = vmatpush1.bf16.msra.mxu0 0
  %540 = vmatprep.subr.bf16.mxu0 0
  %541 = vmatpush1.bf16.msra.mxu0 0
  %542 = vmatprep.mubr.bf16.mxu0 0
  %543 = vmatmul.mubr.bf16.gmra.mrb[0].mxu0 %v438
  %v544 = vpop.f32.mrb[0].mxu0
  %v545 = vadd.f32 %v460, %v544
  %v546 = vpop.f32.mrb[0].mxu0
  %v547 = vpop.f32.mrb[0].mxu0
  %v548 = vadd.f32 %v460, %v547
  %v549 = vpop.f32.mrb[0].mxu0
  %550 = vdwg.mxu0
  %v551 = vxor.u32 %v545, 2147483648
  %v552 = vxor.u32 %v548, 2147483648
  %v553 = vmul.f32 %v551, 1.442695
  %v554 = vpow.pop %v553
  %v555 = vmul.f32 %v552, 1.442695
  %v556 = vpow.pop %v555
  %v557 = vadd.f32 %v554, 1.0
  %v558 = vadd.f32 %v556, 1.0
  %v559 = vrcp.pop %v557
  %v560 = vmul.f32 1.0, %v559
  %v561 = vrcp.pop %v558
  %v562 = vmul.f32 1.0, %v561
  %v563 = vpack.c.bf16 %v562, %v560
  %v565 = vunpack.c.l.b16 %v563
  %v566 = vunpack.c.h.b16 %v563
  %v567 = vpack.c.b16 %v565, %v565
  %v568 = vpack.c.b16 %v566, %v566
  %571 = vst [vmem:[%s9] sm:$0xf] %v567
  %572 = vst [vmem:[%s9 + $0x4] sm:$0xf] %v568
  // Predicated region
  $region38: #{decoder_forward.1} parent=0 // pred_check
    _
  $region39: #{decoder_forward.1} parent=0 // pred_check_branch
    %574 = sbr.rel (0) target = $region41
  $region40: #{decoder_forward.1} parent=0 // pred_region
    _
  $region41: #{decoder_forward.1} parent=0 // pred_fallthru
    _
  // Predicated region
  $region42: #{decoder_forward.1} parent=0 // pred_check
    _
  $region43: #{decoder_forward.1} parent=0 // pred_check_branch
    %576 = sbr.rel (0) target = $region45
  $region44: #{decoder_forward.1} parent=0 // pred_region
    _
  $region45: #{decoder_forward.1} parent=0 // pred_fallthru
    _

</llo_original>
